<compile_context>
chip_gen: v7x
topology: tpu7x:2x2x1
jax: 0.10.0
libtpu: 0.0.40
codegen_flags: <defaults>
</compile_context>

<pallas_src>
import jax
import jax.numpy as jnp
from jax.experimental import pallas as pl
from jax.experimental.pallas import tpu as pltpu


def channel_attention_kernel(x_ref, w_ref, b_ref, o_ref):
    # x_ref : (1, C, HW)  VMEM input tile (one batch element), lane-dense.
    # w_ref : (C, C)      1x1-conv weight, (C_out, C_in) as in PyTorch.
    # b_ref : (C, 1)      1x1-conv bias (column vector -> broadcasts on lanes).
    # o_ref : (1, C, HW)  output tile.
    x = x_ref[0]                                          # (C, HW)

    # Global average pool over the spatial (lane) axis -> (C_in, 1).
    pooled = jnp.mean(x, axis=1, keepdims=True)

    # 1x1 conv == C_out x C_in matmul + bias, f32 accumulation.
    fc = jnp.dot(w_ref[...], pooled,
                 preferred_element_type=jnp.float32) + b_ref[...]   # (C_out, 1)

    ca = jax.nn.sigmoid(fc)                               # (C_out, 1)

    # Per-channel scale, broadcast along the lane (spatial) axis.
    o_ref[0] = (x * ca).astype(o_ref.dtype)


def channel_attention_pallas(x_nchw, w_fc, b_fc):
    """x_nchw: (B, C, H, W) f32; w_fc: (C_out, C_in); b_fc: (C,)."""
    B, C, H, W = x_nchw.shape
    HW = H * W

    # Pure reshape (NCHW is already contiguous in this order): lane axis = H*W.
    x_flat = jnp.reshape(x_nchw, (B, C, HW))
    w = jnp.asarray(w_fc, jnp.float32)                    # (C_out, C_in)
    b = jnp.asarray(b_fc, jnp.float32).reshape(C, 1)      # (C, 1)

    out_flat = pl.pallas_call(
        channel_attention_kernel,
        out_shape=jax.ShapeDtypeStruct((B, C, HW), x_nchw.dtype),
        grid_spec=pltpu.PrefetchScalarGridSpec(
            num_scalar_prefetch=0,
            grid=(B,),
            in_specs=[
                pl.BlockSpec((1, C, HW), lambda bi: (bi, 0, 0)),
                pl.BlockSpec((C, C), lambda bi: (0, 0)),
                pl.BlockSpec((C, 1), lambda bi: (0, 0)),
            ],
            out_specs=pl.BlockSpec((1, C, HW), lambda bi: (bi, 0, 0)),
        ),
        compiler_params=pltpu.CompilerParams(
            dimension_semantics=("parallel",)),
    )(x_flat, w, b)

    return jnp.reshape(out_flat, (B, C, H, W))


def channel_attention_reference(x_nchw, w_fc, b_fc):
    """Pure-JAX reference matching the PyTorch ChannelAttention forward (NCHW)."""
    pooled = jnp.mean(x_nchw, axis=(2, 3))                       # (B, C)
    fc = jnp.einsum('bc,oc->bo', pooled, w_fc) + b_fc            # (B, C_out)
    ca = jax.nn.sigmoid(fc)[:, :, None, None]                    # (B, C, 1, 1)
    return x_nchw * ca


if __name__ == "__main__":
    B, C, H, W = 2, 4, 16, 16
    key = jax.random.PRNGKey(0)
    kx, kw1, kb1 = jax.random.split(key, 3)

    # PyTorch-layout input (NCHW).
    x_nchw = jax.random.normal(kx, (B, C, H, W), jnp.float32)

    # ChannelAttention.fc = Conv2d(C, C, 1, bias=True)
    #   -> weight (C_out, C_in, 1, 1) squeezed to (C_out, C_in), bias (C,)
    w_fc = 0.1 * jax.random.normal(kw1, (C, C), jnp.float32)
    b_fc = 0.1 * jax.random.normal(kb1, (C,), jnp.float32)

    out = channel_attention_pallas(x_nchw, w_fc, b_fc)
    out = jax.block_until_ready(out)

    ref = channel_attention_reference(x_nchw, w_fc, b_fc)
    max_err = float(jnp.max(jnp.abs(out - ref)))
    assert jnp.allclose(out, ref, atol=1e-5, rtol=1e-5), f"max abs err {max_err}"
    print("KERNEL_OK")
</pallas_src>

<mosaic_0001>
module attributes {stable_mosaic.version = 11 : i64} {
  func.func @channel_attention_kernel(%arg0: i32, %arg1: memref<1x4x256xf32, #tpu.memory_space<vmem>>, %arg2: memref<4x4xf32, #tpu.memory_space<vmem>>, %arg3: memref<4x1xf32, #tpu.memory_space<vmem>>, %arg4: memref<1x4x256xf32, #tpu.memory_space<vmem>>) attributes {dimension_semantics = [#tpu.dimension_semantics<parallel>], iteration_bounds = array<i64: 2>, scalar_prefetch = 0 : i64, scratch_operands = 0 : i64, tpu.core_type = #tpu.core_type<tc>, window_params = [{transform_indices = @transform_0, window_bounds = array<i64: 1, 4, 256>}, {pipeline_mode = #tpu.pipeline_mode<synchronous>, transform_indices = @transform_1, window_bounds = array<i64: 4, 4>}, {pipeline_mode = #tpu.pipeline_mode<synchronous>, transform_indices = @transform_2, window_bounds = array<i64: 4, 1>}, {transform_indices = @transform_3, window_bounds = array<i64: 1, 4, 256>}]} {
    %c0 = arith.constant 0 : index
    %c0_0 = arith.constant 0 : index
    %c0_1 = arith.constant 0 : index
    %0 = vector.load %arg1[%c0, %c0_0, %c0_1] : memref<1x4x256xf32, #tpu.memory_space<vmem>>, vector<1x4x256xf32>
    %1 = vector.shape_cast %0 : vector<1x4x256xf32> to vector<4x256xf32>
    %cst = arith.constant dense<0.000000e+00> : vector<4xf32>
    %2 = vector.multi_reduction <add>, %1, %cst [1] : vector<4x256xf32> to vector<4xf32>
    %3 = vector.shape_cast %2 : vector<4xf32> to vector<4x1xf32>
    %cst_2 = arith.constant 2.560000e+02 : f32
    %4 = vector.broadcast %cst_2 : f32 to vector<4x1xf32>
    %5 = arith.divf %3, %4 : vector<4x1xf32>
    %c0_3 = arith.constant 0 : index
    %c0_4 = arith.constant 0 : index
    %6 = vector.load %arg2[%c0_3, %c0_4] : memref<4x4xf32, #tpu.memory_space<vmem>>, vector<4x4xf32>
    %cst_5 = arith.constant dense<0.000000e+00> : vector<4x1xf32>
    %7 = tpu.matmul %6, %5, %cst_5 {dimension_numbers = #tpu.dot_dimension_numbers<[1], [0], [0], [1], [0, 0, 1, 1], [], []>} : vector<4x4xf32>, vector<4x1xf32>, vector<4x1xf32> -> vector<4x1xf32>
    %c0_6 = arith.constant 0 : index
    %c0_7 = arith.constant 0 : index
    %8 = vector.load %arg3[%c0_6, %c0_7] : memref<4x1xf32, #tpu.memory_space<vmem>>, vector<4x1xf32>
    %9 = arith.addf %7, %8 : vector<4x1xf32>
    %10 = arith.negf %9 : vector<4x1xf32>
    %11 = math.exp %10 : vector<4x1xf32>
    %cst_8 = arith.constant 1.000000e+00 : f32
    %12 = vector.broadcast %cst_8 : f32 to vector<4x1xf32>
    %13 = arith.addf %12, %11 : vector<4x1xf32>
    %14 = arith.divf %12, %13 : vector<4x1xf32>
    %15 = vector.broadcast %14 : vector<4x1xf32> to vector<4x256xf32>
    %16 = arith.mulf %1, %15 : vector<4x256xf32>
    %c0_9 = arith.constant 0 : index
    %c0_10 = arith.constant 0 : index
    %c0_11 = arith.constant 0 : index
    %17 = vector.load %arg4[%c0_9, %c0_10, %c0_11] : memref<1x4x256xf32, #tpu.memory_space<vmem>>, vector<1x4x256xf32>
    %18 = vector.shape_cast %17 : vector<1x4x256xf32> to vector<4x256xf32>
    %19 = vector.shape_cast %16 : vector<4x256xf32> to vector<1x4x256xf32>
    tpu.vector_store %arg4[%c0_9, %c0_10, %c0_11], %19 {strides = array<i32>} : memref<1x4x256xf32, #tpu.memory_space<vmem>>, vector<1x4x256xf32>,
    return
  }
  func.func @transform_0(%arg0: i32) -> (i32, i32, i32) {
    %c0_i32 = arith.constant 0 : i32
    %c0_i32_0 = arith.constant 0 : i32
    %c0_i32_1 = arith.constant 0 : i32
    return %arg0, %c0_i32, %c0_i32_0 : i32, i32, i32
  }
  func.func @transform_1(%arg0: i32) -> (i32, i32) {
    %c0_i32 = arith.constant 0 : i32
    %c0_i32_0 = arith.constant 0 : i32
    %c0_i32_1 = arith.constant 0 : i32
    return %c0_i32, %c0_i32_0 : i32, i32
  }
  func.func @transform_2(%arg0: i32) -> (i32, i32) {
    %c0_i32 = arith.constant 0 : i32
    %c0_i32_0 = arith.constant 0 : i32
    %c0_i32_1 = arith.constant 0 : i32
    return %c0_i32, %c0_i32_0 : i32, i32
  }
  func.func @transform_3(%arg0: i32) -> (i32, i32, i32) {
    %c0_i32 = arith.constant 0 : i32
    %c0_i32_0 = arith.constant 0 : i32
    %c0_i32_1 = arith.constant 0 : i32
    return %arg0, %c0_i32, %c0_i32_0 : i32, i32, i32
  }
}

</mosaic_0001>

<llo_original>
// kernel: tpu_custom_call.1
$region0: #{tpu_custom_call.1}
  #allocation0 [shape = 'u32[]', space=smem, size = 0x4, offset = 0x4, fixed_abs, tag = 'smem constant byte address 0x4 - core index']
  #allocation1 [shape = 'u32[144,128]{1,0:T(1,128)}', space=vmem, size = 0x12000, scoped, tag = 'internal scratch']
  %s0 = inlined_call_operand.hbm [shape: f32[2,4,256], index: 0, kind: input, shape index: {}]
  %s1 = inlined_call_operand.vmem [shape: f32[4,4], index: 1, kind: input, shape index: {}]
  %s2 = inlined_call_operand.vmem [shape: f32[4,1], index: 2, kind: input, shape index: {}]
  %s3 = inlined_call_operand.hbm [shape: f32[2,4,256], index: 3, kind: output, shape index: {}]
  %s4 = sld [smem:[#allocation0]]
  $region49: #{tpu_custom_call.1} parent=0
    _
  %s6 = ssub.s32 1, %s4
  %s7 = scalar_select 0, %s6, %s4
  $region1: #{tpu_custom_call.1} parent=0
    #allocation2 [shape = 'u8[8192]{0}', space=vmem, size = 0x2000, scoped, tag = 'input window, operand 0']
    #allocation3 [shape = 's32[2]{0}', space=sflag, size = 0x8, scoped, tag = 'scoped memory for tpu_custom_call.1']
    #allocation4 [shape = 's32[2]{0}', space=sflag, size = 0x8, scoped, tag = 'scoped memory for tpu_custom_call.1']
    #allocation5 [shape = 'u8[8192]{0}', space=vmem, size = 0x2000, scoped, tag = 'output window, operand 0']
    %8 = vsyncpa [#allocation3], 0
    %s9 = scalar_lea.sflag [#allocation3], 1
    %10 = vsyncpa %s9, 0
    %11 = vsyncpa [#allocation4], 0
    %s12 = scalar_lea.sflag [#allocation4], 1
    %13 = vsyncpa %s12, 0
    loop: start=0, step=1, limit=4
    $region2: #{tpu_custom_call.1} parent=1 // loop_pre_header
      _
    $region3: #{tpu_custom_call.1} parent=1 // loop_header
      %s15 = sphi 0, %s19
      %p16 = scmp.ge.s32.totalorder %s15, 4
      %s25 = sphi 0, %s27
      %s28 = sphi 0, %s25
      %s29 = sphi 0, %s28
      %s45 = sphi 0, %s29
      %s49 = sphi 0, %s49
      %s51 = sphi 0, %s49
      %s52 = sphi 0, %s51
      %s66 = sphi 0, %s52
      %s70 = sphi 0, %s70
      %s72 = sphi 0, %s70
      %s73 = sphi 0, %s72
      %s87 = sphi 0, %s73
      %s93 = sphi 0, %s95
      %s96 = sphi 0, %s93
      %s97 = sphi 0, %s96
      %s113 = sphi 0, %s97
    $region4: #{tpu_custom_call.1} parent=1 // loop_header_branch
      %18 = sbr.rel (%p16) target = $region8
    $region5: #{tpu_custom_call.1} parent=1 // loop_body
      %s20 = ssub.s32 %s15, 1
      %s21 = ssub.s32 %s15, 2
      %s22 = sadd.s32 %s15, 1
      %s23 = ssub.s32 %s15, %s22
      %p24 = scmp.eq.s32.totalorder %s23, 0
      %s26 = sadd.s32 %s25, 1
      %s27 = scalar_select %p24, %s25, %s26
      %p30 = pneg %p24
      %p31 = scmp.eq.s32.totalorder %s15, 1
      %p32 = por %p30, %p31
      %p33 = scmp.ne.s32.totalorder %s25, %s28
      %p34 = scmp.eq.s32.totalorder %s15, 0
      %p35 = por %p33, %p34
      %p36 = scmp.ne.s32.totalorder %s25, %s28
      %p37 = scmp.eq.s32.totalorder %s20, 1
      %p38 = por %p36, %p37
      %p39 = scmp.ne.s32.totalorder %s28, %s29
      %p40 = scmp.eq.s32.totalorder %s20, 0
      %p41 = por %p39, %p40
      %p42 = scmp.ne.s32.totalorder %s28, %s29
      %p43 = scmp.eq.s32.totalorder %s21, 1
      %p44 = por %p42, %p43
      %p46 = scmp.ne.s32.totalorder %s29, %s45
      %p47 = scmp.eq.s32.totalorder %s21, 0
      %p48 = por %p46, %p47
      %s50 = sadd.s32 %s49, 1
      %p53 = scmp.eq.s32.totalorder %s15, 1
      %p54 = scmp.ne.s32.totalorder %s49, %s51
      %p55 = scmp.eq.s32.totalorder %s15, 0
      %p56 = por %p54, %p55
      %p57 = scmp.ne.s32.totalorder %s49, %s51
      %p58 = scmp.eq.s32.totalorder %s20, 1
      %p59 = por %p57, %p58
      %p60 = scmp.ne.s32.totalorder %s51, %s52
      %p61 = scmp.eq.s32.totalorder %s20, 0
      %p62 = por %p60, %p61
      %p63 = scmp.ne.s32.totalorder %s51, %s52
      %p64 = scmp.eq.s32.totalorder %s21, 1
      %p65 = por %p63, %p64
      %p67 = scmp.ne.s32.totalorder %s52, %s66
      %p68 = scmp.eq.s32.totalorder %s21, 0
      %p69 = por %p67, %p68
      %s71 = sadd.s32 %s70, 1
      %p74 = scmp.eq.s32.totalorder %s15, 1
      %p75 = scmp.ne.s32.totalorder %s70, %s72
      %p76 = scmp.eq.s32.totalorder %s15, 0
      %p77 = por %p75, %p76
      %p78 = scmp.ne.s32.totalorder %s70, %s72
      %p79 = scmp.eq.s32.totalorder %s20, 1
      %p80 = por %p78, %p79
      %p81 = scmp.ne.s32.totalorder %s72, %s73
      %p82 = scmp.eq.s32.totalorder %s20, 0
      %p83 = por %p81, %p82
      %p84 = scmp.ne.s32.totalorder %s72, %s73
      %p85 = scmp.eq.s32.totalorder %s21, 1
      %p86 = por %p84, %p85
      %p88 = scmp.ne.s32.totalorder %s73, %s87
      %p89 = scmp.eq.s32.totalorder %s21, 0
      %p90 = por %p88, %p89
      %s91 = ssub.s32 %s15, %s22
      %p92 = scmp.eq.s32.totalorder %s91, 0
      %s94 = sadd.s32 %s93, 1
      %s95 = scalar_select %p92, %s93, %s94
      %p98 = pneg %p92
      %p99 = scmp.eq.s32.totalorder %s15, 1
      %p100 = por %p98, %p99
      %p101 = scmp.ne.s32.totalorder %s93, %s96
      %p102 = scmp.eq.s32.totalorder %s15, 0
      %p103 = por %p101, %p102
      %p104 = scmp.ne.s32.totalorder %s93, %s96
      %p105 = scmp.eq.s32.totalorder %s20, 1
      %p106 = por %p104, %p105
      %p107 = scmp.ne.s32.totalorder %s96, %s97
      %p108 = scmp.eq.s32.totalorder %s20, 0
      %p109 = por %p107, %p108
      %p110 = scmp.ne.s32.totalorder %s96, %s97
      %p111 = scmp.eq.s32.totalorder %s21, 1
      %p112 = por %p110, %p111
      %p114 = scmp.ne.s32.totalorder %s97, %s113
      %p115 = scmp.eq.s32.totalorder %s21, 0
      %p116 = por %p114, %p115
      %p117 = scmp.le.s32.totalorder 1, %s15
      %p118 = scmp.lt.s32.totalorder %s15, 3
      %p119 = pnand %p117, %p118
      %p120 = pneg %p119
      // Predicated region
      $region9: #{tpu_custom_call.1} parent=5 // pred_check
        _
      $region10: #{tpu_custom_call.1} parent=5 // pred_check_branch
        %122 = sbr.rel (%p119) target = $region12
      $region11: #{tpu_custom_call.1} parent=5 // pred_region
        %s123 = ssub.s32 %s15, 1
        // Predicated region
        $region13: #{tpu_custom_call.1} parent=11 // pred_check
          %p124 = pneg %p62
        $region14: #{tpu_custom_call.1} parent=11 // pred_check_branch
          %126 = sbr.rel (%p124) target = $region16
        $region15: #{tpu_custom_call.1} parent=11 // pred_region
          _
        $region16: #{tpu_custom_call.1} parent=11 // pred_fallthru
          _
        // Predicated region
        $region17: #{tpu_custom_call.1} parent=11 // pred_check
          %p127 = pneg %p83
        $region18: #{tpu_custom_call.1} parent=11 // pred_check_branch
          %129 = sbr.rel (%p127) target = $region20
        $region19: #{tpu_custom_call.1} parent=11 // pred_region
          _
        $region20: #{tpu_custom_call.1} parent=11 // pred_fallthru
          _
      $region12: #{tpu_custom_call.1} parent=5 // pred_fallthru
        _
      %p130 = scmp.lt.s32.totalorder %s15, 2
      // Predicated region
      $region21: #{tpu_custom_call.1} parent=5 // pred_check
        %p131 = pneg %p130
      $region22: #{tpu_custom_call.1} parent=5 // pred_check_branch
        %133 = sbr.rel (%p131) target = $region24
      $region23: #{tpu_custom_call.1} parent=5 // pred_region
        // Predicated region
        $region25: #{tpu_custom_call.1} parent=23 // pred_check
          %p134 = pneg %p35
        $region26: #{tpu_custom_call.1} parent=23 // pred_check_branch
          %136 = sbr.rel (%p134) target = $region28
        $region27: #{tpu_custom_call.1} parent=23 // pred_region
          %s137 = sand.u32 %s25, 1
          %s138 = scalar_lea.sflag [#allocation3], %s137
          %s139 = sand.u32 %s25, 1
          %s140 = smul.addr %s139, 8
          %s141 = scalar_lea.vmem [#allocation2], %s140
          %s143 = ssub.s32 128, 128
          %144 = vsyncadd %s138, %s143
          %s145 = smul.addr %s15, 2
          %s146 = smul.addr %s145, 64
          %s147 = scalar_lea.hbm %s0, %s146
          %s149 = sshll.u32 %s141, 4
          %s150 = int_to_ptr.vmem [resolvable:$true] %s149
          %152 = dma.hbm_to_vmem [thread:$0]  %s147, 128, %s150, %s138
        $region28: #{tpu_custom_call.1} parent=23 // pred_fallthru
          _
      $region24: #{tpu_custom_call.1} parent=5 // pred_fallthru
        _
      %p153 = scmp.le.s32.totalorder 1, %s15
      %p154 = scmp.lt.s32.totalorder %s15, 3
      %p155 = pnand %p153, %p154
      %p156 = pneg %p155
      // Predicated region
      $region29: #{tpu_custom_call.1} parent=5 // pred_check
        _
      $region30: #{tpu_custom_call.1} parent=5 // pred_check_branch
        %158 = sbr.rel (%p155) target = $region32
      $region31: #{tpu_custom_call.1} parent=5 // pred_region
        %s159 = ssub.s32 %s15, 1
        %s160 = sand.u32 %s28, 1
        %s161 = scalar_lea.sflag [#allocation3], %s160
        %s162 = sand.u32 %s28, 1
        %s163 = smul.addr %s162, 8
        %s164 = scalar_lea.vmem [#allocation2], %s163
        // Predicated region
        $region33: #{tpu_custom_call.1} parent=31 // pred_check
          %p165 = pneg %p41
        $region34: #{tpu_custom_call.1} parent=31 // pred_check_branch
          %167 = sbr.rel (%p165) target = $region36
        $region35: #{tpu_custom_call.1} parent=31 // pred_region
          %168 = dma.done %s161, 128
        $region36: #{tpu_custom_call.1} parent=31 // pred_fallthru
          _
        %s169 = sand.u32 %s28, 1
        %s170 = scalar_lea.sflag [#allocation3], %s169
        %s171 = sand.u32 %s28, 1
        %s172 = smul.addr %s171, 8
        %s173 = scalar_lea.vmem [#allocation2], %s172
        %p174 = pneg %p41
        %p175 = pneg %p38
        %p176 = pneg %p62
        %p177 = pneg %p59
        %p178 = pneg %p83
        %p179 = pneg %p80
        %p180 = pneg %p109
        %p181 = pneg %p106
        %s182 = sand.u32 %s96, 1
        %s183 = scalar_lea.sflag [#allocation4], %s182
        %s184 = sand.u32 %s96, 1
        %s185 = smul.addr %s184, 8
        %s186 = scalar_lea.vmem [#allocation5], %s185
        %v187 = vld [vmem:[%s164] sm:$0xff]
        %v189 = vcombine.high %v187, %v187
        %vm191 = vcmask 1043456
        %v192 = vsel %vm191, %v187, 0.0
        %v193 = vsel %vm191, %v189, 0.0
        %v194 = vadd.f32 %v192, %v193
        %195 = vadd.xlane.f32.xlu0 %v194
        %v196 = vpop.xlane.xlu0 %195
        %v197 = vrcp.pop 256.0
        %v198 = vmul.f32 %v196, %v197
        %v199 = vld [vmem:[%s1] sm:$0xf]
        %v200 = vld [vmem:[%s2] sm:$0xf]
        %vm201 = vcmask 31744
        %v203 = vsel %vm201, %v199, 0
        %v206 = vsel %vm191, %v198, 0
        %208 = vmatprep.subr.mxu0 0.0
        %209 = vmatpush1.msra.mxu0 %v206
        %210 = vmatprep.subr.mxu0 0.0
        %211 = vmatpush1.msra.mxu0 0.0
        %212 = vmatprep.subr.mxu0 0.0
        %213 = vmatpush1.msra.mxu0 0.0
        %214 = vmatprep.subr.mxu0 0.0
        %215 = vmatpush1.msra.mxu0 0.0
        %216 = vmatprep.subr.mxu0 0.0
        %217 = vmatpush1.msra.mxu0 0.0
        %218 = vmatprep.subr.mxu0 0.0
        %219 = vmatpush1.msra.mxu0 0.0
        %220 = vmatprep.subr.mxu0 0.0
        %221 = vmatpush1.msra.mxu0 0.0
        %222 = vmatprep.subr.mxu0 0.0
        %223 = vmatpush1.msra.mxu0 0.0
        %224 = vmatprep.subr.mxu0 0.0
        %225 = vmatpush1.msra.mxu0 0.0
        %226 = vmatprep.subr.mxu0 0.0
        %227 = vmatpush1.msra.mxu0 0.0
        %228 = vmatprep.subr.mxu0 0.0
        %229 = vmatpush1.msra.mxu0 0.0
        %230 = vmatprep.subr.mxu0 0.0
        %231 = vmatpush1.msra.mxu0 0.0
        %232 = vmatprep.subr.mxu0 0.0
        %233 = vmatpush1.msra.mxu0 0.0
        %234 = vmatprep.subr.mxu0 0.0
        %235 = vmatpush1.msra.mxu0 0.0
        %236 = vmatprep.subr.mxu0 0.0
        %237 = vmatpush1.msra.mxu0 0.0
        %238 = vmatprep.subr.mxu0 0.0
        %239 = vmatpush1.msra.mxu0 0.0
        %240 = vmatprep.subr.mxu0 0.0
        %241 = vmatpush1.msra.mxu0 0.0
        %242 = vmatprep.subr.mxu0 0.0
        %243 = vmatpush1.msra.mxu0 0.0
        %244 = vmatprep.subr.mxu0 0.0
        %245 = vmatpush1.msra.mxu0 0.0
        %246 = vmatprep.subr.mxu0 0.0
        %247 = vmatpush1.msra.mxu0 0.0
        %248 = vmatprep.subr.mxu0 0.0
        %249 = vmatpush1.msra.mxu0 0.0
        %250 = vmatprep.subr.mxu0 0.0
        %251 = vmatpush1.msra.mxu0 0.0
        %252 = vmatprep.subr.mxu0 0.0
        %253 = vmatpush1.msra.mxu0 0.0
        %254 = vmatprep.subr.mxu0 0.0
        %255 = vmatpush1.msra.mxu0 0.0
        %256 = vmatprep.subr.mxu0 0.0
        %257 = vmatpush1.msra.mxu0 0.0
        %258 = vmatprep.subr.mxu0 0.0
        %259 = vmatpush1.msra.mxu0 0.0
        %260 = vmatprep.subr.mxu0 0.0
        %261 = vmatpush1.msra.mxu0 0.0
        %262 = vmatprep.subr.mxu0 0.0
        %263 = vmatpush1.msra.mxu0 0.0
        %264 = vmatprep.subr.mxu0 0.0
        %265 = vmatpush1.msra.mxu0 0.0
        %266 = vmatprep.subr.mxu0 0.0
        %267 = vmatpush1.msra.mxu0 0.0
        %268 = vmatprep.subr.mxu0 0.0
        %269 = vmatpush1.msra.mxu0 0.0
        %270 = vmatprep.subr.mxu0 0.0
        %271 = vmatpush1.msra.mxu0 0.0
        %272 = vmatprep.mubr.f32.mxu0 0.0
        %273 = vmatmul.mubr.f32.gmra.mrb[0].mxu0 %v203
        %v274 = vpop.f32.mrb[0].mxu0
        %v275 = vadd.f32 %v200, %v274
        %v276 = vpop.f32.mrb[0].mxu0
        %277 = vdwg.mxu0
        %v278 = vxor.u32 %v275, 2147483648
        %v279 = vmul.f32 %v278, 1.442695
        %v280 = vpow.pop %v279
        %v281 = vadd.f32 %v280, 1.0
        %v282 = vrcp.pop %v281
        %v283 = vmul.f32 1.0, %v282
        %285 = vset.pattern.permute.xlu0 0
        %286 = vperm.xlu0 %285, %v283
        %v287 = vpop.permute.xlu0 %286
        %v289 = vunpack.c.l.s4 839922192
        %v290 = vunpack.c.0.s8 %v289
        %v291 = vlaneseq
        %v292 = vshrl.u32 %v291, 7
        %v293 = vsub.s32 %v290, %v292
        %v294 = vrot.slane %v287, %v293
        %v296 = vmul.f32 %v187, %v294
        %297 = vst [vmem:[%s186] sm:$0xff] %v296
        %s298 = sand.u32 %s96, 1
        %s299 = scalar_lea.sflag [#allocation4], %s298
        %s300 = sand.u32 %s96, 1
        %s301 = smul.addr %s300, 8
        %s302 = scalar_lea.vmem [#allocation5], %s301
        // Predicated region
        $region37: #{tpu_custom_call.1} parent=31 // pred_check
          %p303 = pneg %p106
        $region38: #{tpu_custom_call.1} parent=31 // pred_check_branch
          %305 = sbr.rel (%p303) target = $region40
        $region39: #{tpu_custom_call.1} parent=31 // pred_region
          %s307 = ssub.s32 128, 128
          %308 = vsyncadd %s299, %s307
          %s309 = smul.addr %s20, 2
          %s310 = smul.addr %s309, 64
          %s311 = scalar_lea.hbm %s3, %s310
          %s313 = sshll.u32 %s302, 4
          %s314 = int_to_ptr.vmem [resolvable:$true] %s313
          %316 = dma.vmem_to_hbm [thread:$0]  %s314, 128, %s311, %s299
        $region40: #{tpu_custom_call.1} parent=31 // pred_fallthru
          _
      $region32: #{tpu_custom_call.1} parent=5 // pred_fallthru
        _
      %p317 = scmp.le.s32.totalorder 2, %s15
      // Predicated region
      $region41: #{tpu_custom_call.1} parent=5 // pred_check
        %p318 = pneg %p317
      $region42: #{tpu_custom_call.1} parent=5 // pred_check_branch
        %320 = sbr.rel (%p318) target = $region44
      $region43: #{tpu_custom_call.1} parent=5 // pred_region
        %s321 = ssub.s32 %s15, 2
        // Predicated region
        $region45: #{tpu_custom_call.1} parent=43 // pred_check
          %p322 = pneg %p112
        $region46: #{tpu_custom_call.1} parent=43 // pred_check_branch
          %324 = sbr.rel (%p322) target = $region48
        $region47: #{tpu_custom_call.1} parent=43 // pred_region
          %s325 = sand.u32 %s97, 1
          %s326 = scalar_lea.sflag [#allocation4], %s325
          %s327 = sand.u32 %s97, 1
          %s328 = smul.addr %s327, 8
          %s329 = scalar_lea.vmem [#allocation5], %s328
          %330 = dma.done %s326, 128
        $region48: #{tpu_custom_call.1} parent=43 // pred_fallthru
          _
      $region44: #{tpu_custom_call.1} parent=5 // pred_fallthru
        _
    $region6: #{tpu_custom_call.1} parent=1 // loop_footer
      %s19 = sadd.s32 1, %s15
    $region7: #{tpu_custom_call.1} parent=1 // loop_footer_branch
      %14 = sbr.rel target = $region3
    $region8: #{tpu_custom_call.1} parent=1 // loop_exit
      _
    %331 = vsyncpa [#allocation3], 1
    %s332 = scalar_lea.sflag [#allocation3], 1
    %333 = vsyncpa %s332, 1
    %334 = vsyncpa [#allocation4], 1
    %s335 = scalar_lea.sflag [#allocation4], 1
    %336 = vsyncpa %s335, 1

</llo_original>
